<compile_context>
chip_gen: v7x
topology: tpu7x:2x2x1
jax: 0.10.0
libtpu: 0.0.40
codegen_flags: <defaults>
</compile_context>

<pallas_src>
import functools

import jax
import jax.numpy as jnp
from jax.experimental import pallas as pl
from jax.experimental.pallas import tpu as pltpu

_LANES = 128


def _wbce_kernel(p_ref, t_ref, o_ref, *,
                 smooth, w0n, w1n, sce, sce_w, s_block, m_valid, has_pad):
    j = pl.program_id(1)   # reduction axis (chunks of sublanes)

    @pl.when(j == 0)
    def _():
        o_ref[...] = jnp.zeros_like(o_ref)

    # predict.clamp(min=smooth)
    p = jnp.maximum(p_ref[...].astype(jnp.float32), smooth)
    t = t_ref[...].astype(jnp.float32)

    # weights pre-normalized by sum(pos_weight) in the wrapper
    loss = -(w0n * t * jnp.log(p + smooth)
             + w1n * (1.0 - t) * jnp.log(1.0 - p + smooth))

    if sce:
        loss_sce = -(w0n * p * jnp.log(jnp.clip(t, 0.0001, 1.0))
                     + w1n * (1.0 - p) * jnp.log(jnp.clip(1.0 - t, 0.0001, 1.0)))
        loss = (1.0 - sce_w) * loss + sce_w * loss_sce

    if has_pad:
        # mask out elements past the true row length M
        r = jax.lax.broadcasted_iota(jnp.int32, loss.shape, 1)
        l = jax.lax.broadcasted_iota(jnp.int32, loss.shape, 2)
        idx = (j * s_block + r) * _LANES + l
        loss = jnp.where(idx < m_valid, loss, 0.0)

    # lane-wide partial sum; cross-lane reduce happens once in the wrapper
    o_ref[...] += jnp.sum(loss, axis=1, keepdims=True)


def weighted_bce_loss(predict, target, *, smooth=1e-8, pos_weight=(1.0, 1.0),
                      sce=False, sce_weight=0.1, max_sublanes=2048):
    """Pallas equivalent of WeightedBCELoss.forward with reduction='mean'.

    predict, target: (N, C, H, W) float arrays. Returns (N,) float32.
    """
    assert predict.shape == target.shape
    N = predict.shape[0]
    M = 1
    for d in predict.shape[1:]:
        M *= d

    p2 = predict.reshape(N, M)
    t2 = target.reshape(N, M)

    # Choose a lane-dense tiling: (N, R, 128) with blocks (1, S, 128),
    # S a multiple of 8, up to `max_sublanes` (block ~<= 1 MiB for f32).
    r = (M + _LANES - 1) // _LANES
    r = max(8, ((r + 7) // 8) * 8)            # multiple of 8 sublanes
    if r <= max_sublanes:
        s, g = r, 1
    else:
        g = (r + max_sublanes - 1) // max_sublanes
        s = ((((r + g - 1) // g) + 7) // 8) * 8
        r = s * g

    m_pad = r * _LANES
    has_pad = (m_pad != M)
    if has_pad:
        # pad values are masked in the kernel; 1.0 keeps all logs well-behaved
        p2 = jnp.pad(p2, ((0, 0), (0, m_pad - M)), constant_values=1.0)
        t2 = jnp.pad(t2, ((0, 0), (0, m_pad - M)), constant_values=1.0)

    p3 = p2.reshape(N, r, _LANES)
    t3 = t2.reshape(N, r, _LANES)

    w0, w1 = float(pos_weight[0]), float(pos_weight[1])
    wsum = w0 + w1

    kernel = functools.partial(
        _wbce_kernel,
        smooth=float(smooth),
        w0n=w0 / wsum,
        w1n=w1 / wsum,
        sce=bool(sce),
        sce_w=float(sce_weight),
        s_block=int(s),
        m_valid=int(M),
        has_pad=bool(has_pad),
    )

    block_bytes = s * _LANES * p3.dtype.itemsize
    # 2 inputs x 2 pipeline buffers x block, plus slack; floor at the default
    vmem_limit = min(100 * 1024 * 1024,
                     max(32 * 1024 * 1024, 4 * block_bytes + (4 << 20)))

    partial = pl.pallas_call(
        kernel,
        out_shape=jax.ShapeDtypeStruct((N, 1, _LANES), jnp.float32),
        grid_spec=pltpu.PrefetchScalarGridSpec(
            num_scalar_prefetch=0,
            grid=(N, g),
            in_specs=[
                pl.BlockSpec((1, s, _LANES), lambda n, j: (n, j, 0)),
                pl.BlockSpec((1, s, _LANES), lambda n, j: (n, j, 0)),
            ],
            out_specs=pl.BlockSpec((1, 1, _LANES), lambda n, j: (n, 0, 0)),
        ),
        compiler_params=pltpu.CompilerParams(
            dimension_semantics=("parallel", "arbitrary"),
            vmem_limit_bytes=int(vmem_limit),
        ),
    )(p3, t3)

    # tiny final cross-lane reduce + mean normalization
    return partial.sum(axis=(1, 2)) * jnp.float32(1.0 / M)
    # TODO(synk): reduction='sum' / 'none' variants not wired up (module default is 'mean').


def _reference(predict, target, smooth=1e-8, pos_weight=(1.0, 1.0),
               sce=False, sce_weight=0.1):
    p = jnp.maximum(predict, smooth)
    w0, w1 = pos_weight
    loss = -(w0 * target * jnp.log(p + smooth)
             + w1 * (1 - target) * jnp.log(1 - p + smooth)) / (w0 + w1)
    if sce:
        loss_sce = -(w0 * p * jnp.log(jnp.clip(target, 0.0001, 1.0))
                     + w1 * (1 - p) * jnp.log(jnp.clip(1 - target, 0.0001, 1.0))) / (w0 + w1)
        loss = (1 - sce_weight) * loss + sce_weight * loss_sce
    return loss.mean(axis=(1, 2, 3))


if __name__ == "__main__":
    key = jax.random.PRNGKey(0)
    kp, kt, kp2, kt2 = jax.random.split(key, 4)

    # Main case: M = C*H*W = 1024 (multiple of 128), default params.
    N, C, H, W = 2, 4, 16, 16
    predict = jax.nn.sigmoid(jax.random.normal(kp, (N, C, H, W), jnp.float32))
    target = (jax.random.uniform(kt, (N, C, H, W), jnp.float32) > 0.5).astype(jnp.float32)

    out = jax.block_until_ready(weighted_bce_loss(predict, target))
    ref = _reference(predict, target)
    assert out.shape == (N,)
    assert jnp.allclose(out, ref, rtol=1e-5, atol=1e-6), (out, ref)

    # SCE branch enabled.
    out_sce = jax.block_until_ready(
        weighted_bce_loss(predict, target, sce=True, sce_weight=0.1))
    ref_sce = _reference(predict, target, sce=True, sce_weight=0.1)
    assert jnp.allclose(out_sce, ref_sce, rtol=1e-5, atol=1e-6), (out_sce, ref_sce)

    # Non-128-multiple M exercises the pad + in-kernel mask path.
    N2, C2, H2, W2 = 2, 3, 10, 10
    predict2 = jax.nn.sigmoid(jax.random.normal(kp2, (N2, C2, H2, W2), jnp.float32))
    target2 = (jax.random.uniform(kt2, (N2, C2, H2, W2), jnp.float32) > 0.5).astype(jnp.float32)
    out2 = jax.block_until_ready(weighted_bce_loss(predict2, target2))
    ref2 = _reference(predict2, target2)
    assert jnp.allclose(out2, ref2, rtol=1e-5, atol=1e-6), (out2, ref2)

    print("KERNEL_OK")
</pallas_src>

<mosaic_0001>
module attributes {stable_mosaic.version = 11 : i64} {
  func.func @_wbce_kernel(%arg0: i32, %arg1: i32, %arg2: memref<1x8x128xf32, #tpu.memory_space<vmem>>, %arg3: memref<1x8x128xf32, #tpu.memory_space<vmem>>, %arg4: memref<1x1x128xf32, #tpu.memory_space<vmem>>) attributes {dimension_semantics = [#tpu.dimension_semantics<parallel>, #tpu.dimension_semantics<arbitrary>], iteration_bounds = array<i64: 2, 1>, scalar_prefetch = 0 : i64, scratch_operands = 0 : i64, tpu.core_type = #tpu.core_type<tc>, window_params = [{transform_indices = @transform_0, window_bounds = array<i64: 1, 8, 128>}, {transform_indices = @transform_1, window_bounds = array<i64: 1, 8, 128>}, {transform_indices = @transform_2, window_bounds = array<i64: 1, 1, 128>}]} {
    %c0_i32 = arith.constant 0 : i32
    %0 = arith.cmpi eq, %arg1, %c0_i32 : i32
    %1 = arith.extui %0 : i1 to i32
    %c0_i32_0 = arith.constant 0 : i32
    %2 = arith.cmpi ne, %1, %c0_i32_0 : i32
    scf.if %2 {
      %cst_20 = arith.constant 0.000000e+00 : f32
      %31 = vector.broadcast %cst_20 : f32 to vector<1x1x128xf32>
      %c0_21 = arith.constant 0 : index
      %c0_22 = arith.constant 0 : index
      %c0_23 = arith.constant 0 : index
      %32 = vector.load %arg4[%c0_21, %c0_22, %c0_23] : memref<1x1x128xf32, #tpu.memory_space<vmem>>, vector<1x1x128xf32>
      tpu.vector_store %arg4[%c0_21, %c0_22, %c0_23], %31 {strides = array<i32>} : memref<1x1x128xf32, #tpu.memory_space<vmem>>, vector<1x1x128xf32>,
    } else {
    }
    %c0 = arith.constant 0 : index
    %c0_1 = arith.constant 0 : index
    %c0_2 = arith.constant 0 : index
    %3 = vector.load %arg2[%c0, %c0_1, %c0_2] : memref<1x8x128xf32, #tpu.memory_space<vmem>>, vector<1x8x128xf32>
    %cst = arith.constant 9.99999993E-9 : f32
    %4 = vector.broadcast %cst : f32 to vector<1x8x128xf32>
    %5 = arith.maximumf %3, %4 : vector<1x8x128xf32>
    %c0_3 = arith.constant 0 : index
    %c0_4 = arith.constant 0 : index
    %c0_5 = arith.constant 0 : index
    %6 = vector.load %arg3[%c0_3, %c0_4, %c0_5] : memref<1x8x128xf32, #tpu.memory_space<vmem>>, vector<1x8x128xf32>
    %cst_6 = arith.constant 5.000000e-01 : f32
    %7 = vector.broadcast %cst_6 : f32 to vector<1x8x128xf32>
    %8 = arith.mulf %7, %6 : vector<1x8x128xf32>
    %cst_7 = arith.constant 9.99999993E-9 : f32
    %9 = vector.broadcast %cst_7 : f32 to vector<1x8x128xf32>
    %10 = arith.addf %5, %9 : vector<1x8x128xf32>
    %11 = math.log %10 : vector<1x8x128xf32>
    %12 = arith.mulf %8, %11 : vector<1x8x128xf32>
    %cst_8 = arith.constant 1.000000e+00 : f32
    %13 = vector.broadcast %cst_8 : f32 to vector<1x8x128xf32>
    %14 = arith.subf %13, %6 : vector<1x8x128xf32>
    %cst_9 = arith.constant 5.000000e-01 : f32
    %15 = vector.broadcast %cst_9 : f32 to vector<1x8x128xf32>
    %16 = arith.mulf %15, %14 : vector<1x8x128xf32>
    %cst_10 = arith.constant 1.000000e+00 : f32
    %17 = vector.broadcast %cst_10 : f32 to vector<1x8x128xf32>
    %18 = arith.subf %17, %5 : vector<1x8x128xf32>
    %cst_11 = arith.constant 9.99999993E-9 : f32
    %19 = vector.broadcast %cst_11 : f32 to vector<1x8x128xf32>
    %20 = arith.addf %18, %19 : vector<1x8x128xf32>
    %21 = math.log %20 : vector<1x8x128xf32>
    %22 = arith.mulf %16, %21 : vector<1x8x128xf32>
    %23 = arith.addf %12, %22 : vector<1x8x128xf32>
    %cst_12 = arith.constant 0.000000e+00 : f32
    %24 = vector.broadcast %cst_12 : f32 to vector<1x8x128xf32>
    %25 = arith.subf %24, %23 : vector<1x8x128xf32>
    %c0_13 = arith.constant 0 : index
    %c0_14 = arith.constant 0 : index
    %c0_15 = arith.constant 0 : index
    %26 = vector.load %arg4[%c0_13, %c0_14, %c0_15] : memref<1x1x128xf32, #tpu.memory_space<vmem>>, vector<1x1x128xf32>
    %cst_16 = arith.constant dense<0.000000e+00> : vector<1x128xf32>
    %27 = vector.multi_reduction <add>, %25, %cst_16 [1] : vector<1x8x128xf32> to vector<1x128xf32>
    %28 = vector.shape_cast %27 : vector<1x128xf32> to vector<1x1x128xf32>
    %29 = arith.addf %26, %28 : vector<1x1x128xf32>
    %c0_17 = arith.constant 0 : index
    %c0_18 = arith.constant 0 : index
    %c0_19 = arith.constant 0 : index
    %30 = vector.load %arg4[%c0_17, %c0_18, %c0_19] : memref<1x1x128xf32, #tpu.memory_space<vmem>>, vector<1x1x128xf32>
    tpu.vector_store %arg4[%c0_17, %c0_18, %c0_19], %29 {strides = array<i32>} : memref<1x1x128xf32, #tpu.memory_space<vmem>>, vector<1x1x128xf32>,
    return
  }
  func.func @transform_0(%arg0: i32, %arg1: i32) -> (i32, i32, i32) {
    %c0_i32 = arith.constant 0 : i32
    %c0_i32_0 = arith.constant 0 : i32
    return %arg0, %arg1, %c0_i32 : i32, i32, i32
  }
  func.func @transform_1(%arg0: i32, %arg1: i32) -> (i32, i32, i32) {
    %c0_i32 = arith.constant 0 : i32
    %c0_i32_0 = arith.constant 0 : i32
    return %arg0, %arg1, %c0_i32 : i32, i32, i32
  }
  func.func @transform_2(%arg0: i32, %arg1: i32) -> (i32, i32, i32) {
    %c0_i32 = arith.constant 0 : i32
    %c0_i32_0 = arith.constant 0 : i32
    %c0_i32_1 = arith.constant 0 : i32
    return %arg0, %c0_i32, %c0_i32_0 : i32, i32, i32
  }
}

</mosaic_0001>

<llo_original>
// kernel: tpu_custom_call.1
$region0: #{tpu_custom_call.1}
  #allocation0 [shape = 'u32[]', space=smem, size = 0x4, offset = 0x4, fixed_abs, tag = 'smem constant byte address 0x4 - core index']
  #allocation1 [shape = 'u32[144,128]{1,0:T(1,128)}', space=vmem, size = 0x12000, scoped, tag = 'internal scratch']
  %s0 = inlined_call_operand.hbm [shape: f32[2,8,128], index: 0, kind: input, shape index: {}]
  %s1 = inlined_call_operand.hbm [shape: f32[2,8,128], index: 1, kind: input, shape index: {}]
  %s2 = inlined_call_operand.hbm [shape: f32[2,1,128], index: 2, kind: output, shape index: {}]
  %s3 = sld [smem:[#allocation0]]
  $region53: #{tpu_custom_call.1} parent=0
    _
  %s5 = ssub.s32 1, %s3
  %s6 = scalar_select 0, %s5, %s3
  $region1: #{tpu_custom_call.1} parent=0
    #allocation2 [shape = 'u8[8192]{0}', space=vmem, size = 0x2000, scoped, tag = 'input window, operand 0']
    #allocation3 [shape = 's32[2]{0}', space=sflag, size = 0x8, scoped, tag = 'scoped memory for tpu_custom_call.1']
    #allocation4 [shape = 's32[2]{0}', space=sflag, size = 0x8, scoped, tag = 'scoped memory for tpu_custom_call.1']
    #allocation5 [shape = 'u8[8192]{0}', space=vmem, size = 0x2000, scoped, tag = 'input window, operand 1']
    #allocation6 [shape = 's32[2]{0}', space=sflag, size = 0x8, scoped, tag = 'scoped memory for tpu_custom_call.1']
    #allocation7 [shape = 'u8[1024]{0}', space=vmem, size = 0x400, scoped, tag = 'output window, operand 0']
    %7 = vsyncpa [#allocation3], 0
    %s8 = scalar_lea.sflag [#allocation3], 1
    %9 = vsyncpa %s8, 0
    %10 = vsyncpa [#allocation6], 0
    %s11 = scalar_lea.sflag [#allocation6], 1
    %12 = vsyncpa %s11, 0
    %13 = vsyncpa [#allocation4], 0
    %s14 = scalar_lea.sflag [#allocation4], 1
    %15 = vsyncpa %s14, 0
    loop: start=0, step=1, limit=4
    $region2: #{tpu_custom_call.1} parent=1 // loop_pre_header
      _
    $region3: #{tpu_custom_call.1} parent=1 // loop_header
      %s17 = sphi 0, %s21
      %p18 = scmp.ge.s32.totalorder %s17, 4
      %s24 = sphi 0, %s36
      %s25 = sphi 0, %s32
      %s26 = sphi 0, %s24
      %s27 = sphi 0, %s25
      %s28 = sphi 0, %s26
      %s29 = sphi 0, %s27
      %s41 = sphi 0, %s43
      %s44 = sphi 0, %s41
      %s45 = sphi 0, %s44
      %s61 = sphi 0, %s45
      %s69 = sphi 0, %s71
      %s72 = sphi 0, %s69
      %s73 = sphi 0, %s72
      %s89 = sphi 0, %s73
      %s95 = sphi 0, %s97
      %s98 = sphi 0, %s95
      %s99 = sphi 0, %s98
      %s115 = sphi 0, %s99
    $region4: #{tpu_custom_call.1} parent=1 // loop_header_branch
      %20 = sbr.rel (%p18) target = $region8
    $region5: #{tpu_custom_call.1} parent=1 // loop_body
      %s22 = ssub.s32 %s17, 1
      %s23 = ssub.s32 %s17, 2
      %s30 = sadd.s32 1, %s25
      %p31 = scmp.ge.s32.totalorder %s30, 1
      %s32 = scalar_select %p31, 0, %s30
      %s33 = sadd.s32 1, %s24
      %s34 = scalar_select %p31, %s33, %s24
      %p35 = scmp.ge.s32.totalorder %s34, 2
      %s36 = scalar_select %p35, 0, %s34
      %s37 = ssub.s32 %s24, %s36
      %s38 = ssub.s32 %s25, %s32
      %s39 = sor.u32 %s37, %s38
      %p40 = scmp.eq.s32.totalorder %s39, 0
      %s42 = sadd.s32 %s41, 1
      %s43 = scalar_select %p40, %s41, %s42
      %p46 = pneg %p40
      %p47 = scmp.eq.s32.totalorder %s17, 1
      %p48 = por %p46, %p47
      %p49 = scmp.ne.s32.totalorder %s41, %s44
      %p50 = scmp.eq.s32.totalorder %s17, 0
      %p51 = por %p49, %p50
      %p52 = scmp.ne.s32.totalorder %s41, %s44
      %p53 = scmp.eq.s32.totalorder %s22, 1
      %p54 = por %p52, %p53
      %p55 = scmp.ne.s32.totalorder %s44, %s45
      %p56 = scmp.eq.s32.totalorder %s22, 0
      %p57 = por %p55, %p56
      %p58 = scmp.ne.s32.totalorder %s44, %s45
      %p59 = scmp.eq.s32.totalorder %s23, 1
      %p60 = por %p58, %p59
      %p62 = scmp.ne.s32.totalorder %s45, %s61
      %p63 = scmp.eq.s32.totalorder %s23, 0
      %p64 = por %p62, %p63
      %s65 = ssub.s32 %s24, %s36
      %s66 = ssub.s32 %s25, %s32
      %s67 = sor.u32 %s65, %s66
      %p68 = scmp.eq.s32.totalorder %s67, 0
      %s70 = sadd.s32 %s69, 1
      %s71 = scalar_select %p68, %s69, %s70
      %p74 = pneg %p68
      %p75 = scmp.eq.s32.totalorder %s17, 1
      %p76 = por %p74, %p75
      %p77 = scmp.ne.s32.totalorder %s69, %s72
      %p78 = scmp.eq.s32.totalorder %s17, 0
      %p79 = por %p77, %p78
      %p80 = scmp.ne.s32.totalorder %s69, %s72
      %p81 = scmp.eq.s32.totalorder %s22, 1
      %p82 = por %p80, %p81
      %p83 = scmp.ne.s32.totalorder %s72, %s73
      %p84 = scmp.eq.s32.totalorder %s22, 0
      %p85 = por %p83, %p84
      %p86 = scmp.ne.s32.totalorder %s72, %s73
      %p87 = scmp.eq.s32.totalorder %s23, 1
      %p88 = por %p86, %p87
      %p90 = scmp.ne.s32.totalorder %s73, %s89
      %p91 = scmp.eq.s32.totalorder %s23, 0
      %p92 = por %p90, %p91
      %s93 = ssub.s32 %s24, %s36
      %p94 = scmp.eq.s32.totalorder %s93, 0
      %s96 = sadd.s32 %s95, 1
      %s97 = scalar_select %p94, %s95, %s96
      %p100 = pneg %p94
      %p101 = scmp.eq.s32.totalorder %s17, 1
      %p102 = por %p100, %p101
      %p103 = scmp.ne.s32.totalorder %s95, %s98
      %p104 = scmp.eq.s32.totalorder %s17, 0
      %p105 = por %p103, %p104
      %p106 = scmp.ne.s32.totalorder %s95, %s98
      %p107 = scmp.eq.s32.totalorder %s22, 1
      %p108 = por %p106, %p107
      %p109 = scmp.ne.s32.totalorder %s98, %s99
      %p110 = scmp.eq.s32.totalorder %s22, 0
      %p111 = por %p109, %p110
      %p112 = scmp.ne.s32.totalorder %s98, %s99
      %p113 = scmp.eq.s32.totalorder %s23, 1
      %p114 = por %p112, %p113
      %p116 = scmp.ne.s32.totalorder %s99, %s115
      %p117 = scmp.eq.s32.totalorder %s23, 0
      %p118 = por %p116, %p117
      %p119 = scmp.le.s32.totalorder 1, %s17
      %p120 = scmp.lt.s32.totalorder %s17, 3
      %p121 = pnand %p119, %p120
      %p122 = pneg %p121
      // Predicated region
      $region9: #{tpu_custom_call.1} parent=5 // pred_check
        _
      $region10: #{tpu_custom_call.1} parent=5 // pred_check_branch
        %124 = sbr.rel (%p121) target = $region12
      $region11: #{tpu_custom_call.1} parent=5 // pred_region
        %s125 = ssub.s32 %s17, 1
      $region12: #{tpu_custom_call.1} parent=5 // pred_fallthru
        _
      %p126 = scmp.lt.s32.totalorder %s17, 2
      // Predicated region
      $region13: #{tpu_custom_call.1} parent=5 // pred_check
        %p127 = pneg %p126
      $region14: #{tpu_custom_call.1} parent=5 // pred_check_branch
        %129 = sbr.rel (%p127) target = $region16
      $region15: #{tpu_custom_call.1} parent=5 // pred_region
        // Predicated region
        $region17: #{tpu_custom_call.1} parent=15 // pred_check
          %p130 = pneg %p51
        $region18: #{tpu_custom_call.1} parent=15 // pred_check_branch
          %132 = sbr.rel (%p130) target = $region20
        $region19: #{tpu_custom_call.1} parent=15 // pred_region
          %s133 = sand.u32 %s41, 1
          %s134 = scalar_lea.sflag [#allocation3], %s133
          %s135 = sand.u32 %s41, 1
          %s136 = smul.addr %s135, 8
          %s137 = scalar_lea.vmem [#allocation2], %s136
          %s139 = ssub.s32 128, 128
          %140 = vsyncadd %s134, %s139
          %s141 = sadd.s32 %s25, %s24
          %s142 = smul.addr %s141, 128
          %s143 = scalar_lea.hbm %s0, %s142
          %s145 = sshll.u32 %s137, 4
          %s146 = int_to_ptr.vmem [resolvable:$true] %s145
          %148 = dma.hbm_to_vmem [thread:$0]  %s143, 128, %s146, %s134
        $region20: #{tpu_custom_call.1} parent=15 // pred_fallthru
          _
        // Predicated region
        $region21: #{tpu_custom_call.1} parent=15 // pred_check
          %p149 = pneg %p79
        $region22: #{tpu_custom_call.1} parent=15 // pred_check_branch
          %151 = sbr.rel (%p149) target = $region24
        $region23: #{tpu_custom_call.1} parent=15 // pred_region
          %s152 = sand.u32 %s69, 1
          %s153 = scalar_lea.sflag [#allocation6], %s152
          %s154 = sand.u32 %s69, 1
          %s155 = smul.addr %s154, 8
          %s156 = scalar_lea.vmem [#allocation5], %s155
          %s158 = ssub.s32 128, 128
          %159 = vsyncadd %s153, %s158
          %s160 = sadd.s32 %s25, %s24
          %s161 = smul.addr %s160, 128
          %s162 = scalar_lea.hbm %s1, %s161
          %s164 = sshll.u32 %s156, 4
          %s165 = int_to_ptr.vmem [resolvable:$true] %s164
          %167 = dma.hbm_to_vmem [thread:$0]  %s162, 128, %s165, %s153
        $region24: #{tpu_custom_call.1} parent=15 // pred_fallthru
          _
      $region16: #{tpu_custom_call.1} parent=5 // pred_fallthru
        _
      %p168 = scmp.le.s32.totalorder 1, %s17
      %p169 = scmp.lt.s32.totalorder %s17, 3
      %p170 = pnand %p168, %p169
      %p171 = pneg %p170
      // Predicated region
      $region25: #{tpu_custom_call.1} parent=5 // pred_check
        _
      $region26: #{tpu_custom_call.1} parent=5 // pred_check_branch
        %173 = sbr.rel (%p170) target = $region28
      $region27: #{tpu_custom_call.1} parent=5 // pred_region
        %s174 = ssub.s32 %s17, 1
        %s175 = sand.u32 %s44, 1
        %s176 = scalar_lea.sflag [#allocation3], %s175
        %s177 = sand.u32 %s44, 1
        %s178 = smul.addr %s177, 8
        %s179 = scalar_lea.vmem [#allocation2], %s178
        // Predicated region
        $region29: #{tpu_custom_call.1} parent=27 // pred_check
          %p180 = pneg %p57
        $region30: #{tpu_custom_call.1} parent=27 // pred_check_branch
          %182 = sbr.rel (%p180) target = $region32
        $region31: #{tpu_custom_call.1} parent=27 // pred_region
          %183 = dma.done %s176, 128
        $region32: #{tpu_custom_call.1} parent=27 // pred_fallthru
          _
        %s184 = sand.u32 %s72, 1
        %s185 = scalar_lea.sflag [#allocation6], %s184
        %s186 = sand.u32 %s72, 1
        %s187 = smul.addr %s186, 8
        %s188 = scalar_lea.vmem [#allocation5], %s187
        // Predicated region
        $region33: #{tpu_custom_call.1} parent=27 // pred_check
          %p189 = pneg %p85
        $region34: #{tpu_custom_call.1} parent=27 // pred_check_branch
          %191 = sbr.rel (%p189) target = $region36
        $region35: #{tpu_custom_call.1} parent=27 // pred_region
          %192 = dma.done %s185, 128
        $region36: #{tpu_custom_call.1} parent=27 // pred_fallthru
          _
        %s193 = sand.u32 %s44, 1
        %s194 = scalar_lea.sflag [#allocation3], %s193
        %s195 = sand.u32 %s44, 1
        %s196 = smul.addr %s195, 8
        %s197 = scalar_lea.vmem [#allocation2], %s196
        %p198 = pneg %p57
        %p199 = pneg %p54
        %s200 = sand.u32 %s72, 1
        %s201 = scalar_lea.sflag [#allocation6], %s200
        %s202 = sand.u32 %s72, 1
        %s203 = smul.addr %s202, 8
        %s204 = scalar_lea.vmem [#allocation5], %s203
        %p205 = pneg %p85
        %p206 = pneg %p82
        %p207 = pneg %p111
        %p208 = pneg %p108
        %s209 = sand.u32 %s98, 1
        %s210 = scalar_lea.sflag [#allocation4], %s209
        %s211 = sand.u32 %s98, 1
        %s212 = scalar_lea.vmem [#allocation7], %s211
        %p213 = scmp.eq.s32.totalorder %s27, 0
        // Predicated region
        $region37: #{tpu_custom_call.1} parent=27 // pred_check
          %p214 = pneg %p213
        $region38: #{tpu_custom_call.1} parent=27 // pred_check_branch
          %216 = sbr.rel (%p214) target = $region40
        $region39: #{tpu_custom_call.1} parent=27 // pred_region
          %217 = vst [vmem:[%s212] sm:$0x1] 0.0
        $region40: #{tpu_custom_call.1} parent=27 // pred_fallthru
          _
        %v218 = vld [vmem:[%s179] sm:$0xff]
        %v219 = vmax.f32 %v218, 1e-08
        %v220 = vld [vmem:[%s188] sm:$0xff]
        %v221 = vmul.f32 %v220, 0.5
        %v222 = vadd.f32 %v219, 1e-08
        %v223 = vlog2.pop %v222
        %v224 = vmul.f32 %v223, 0.6931472
        %v225 = vmul.f32 %v221, %v224
        %v226 = vsub.f32 1.0, %v220
        %v227 = vmul.f32 %v226, 0.5
        %v228 = vsub.f32 1.0, %v219
        %v229 = vadd.f32 %v228, 1e-08
        %v230 = vlog2.pop %v229
        %v231 = vmul.f32 %v230, 0.6931472
        %v232 = vmul.f32 %v227, %v231
        %v233 = vadd.f32 %v225, %v232
        %v234 = vsub.f32 0.0, %v233
        %v235 = vld [vmem:[%s212] sm:$0x1]
        %v236 = vrot.slane %v234, 4
        %v237 = vadd.f32 %v234, %v236
        %v238 = vrot.slane %v237, 2
        %v239 = vadd.f32 %v237, %v238
        %v240 = vrot.slane %v239, 1
        %v241 = vadd.f32 %v239, %v240
        %v242 = vadd.f32 %v235, %v241
        %243 = vst [vmem:[%s212] sm:$0x1] %v242
        %s244 = sand.u32 %s98, 1
        %s245 = scalar_lea.sflag [#allocation4], %s244
        %s246 = sand.u32 %s98, 1
        %s247 = scalar_lea.vmem [#allocation7], %s246
        // Predicated region
        $region41: #{tpu_custom_call.1} parent=27 // pred_check
          %p248 = pneg %p108
        $region42: #{tpu_custom_call.1} parent=27 // pred_check_branch
          %250 = sbr.rel (%p248) target = $region44
        $region43: #{tpu_custom_call.1} parent=27 // pred_region
          %s252 = ssub.s32 16, 16
          %253 = vsyncadd %s245, %s252
          %s254 = smul.addr %s26, 16
          %s255 = scalar_lea.hbm %s2, %s254
          %s257 = sshll.u32 %s247, 4
          %s258 = int_to_ptr.vmem [resolvable:$true] %s257
          %260 = dma.vmem_to_hbm [thread:$0]  %s258, 16, %s255, %s245
        $region44: #{tpu_custom_call.1} parent=27 // pred_fallthru
          _
      $region28: #{tpu_custom_call.1} parent=5 // pred_fallthru
        _
      %p261 = scmp.le.s32.totalorder 2, %s17
      // Predicated region
      $region45: #{tpu_custom_call.1} parent=5 // pred_check
        %p262 = pneg %p261
      $region46: #{tpu_custom_call.1} parent=5 // pred_check_branch
        %264 = sbr.rel (%p262) target = $region48
      $region47: #{tpu_custom_call.1} parent=5 // pred_region
        %s265 = ssub.s32 %s17, 2
        // Predicated region
        $region49: #{tpu_custom_call.1} parent=47 // pred_check
          %p266 = pneg %p114
        $region50: #{tpu_custom_call.1} parent=47 // pred_check_branch
          %268 = sbr.rel (%p266) target = $region52
        $region51: #{tpu_custom_call.1} parent=47 // pred_region
          %s269 = sand.u32 %s99, 1
          %s270 = scalar_lea.sflag [#allocation4], %s269
          %s271 = sand.u32 %s99, 1
          %s272 = scalar_lea.vmem [#allocation7], %s271
          %273 = dma.done %s270, 16
        $region52: #{tpu_custom_call.1} parent=47 // pred_fallthru
          _
      $region48: #{tpu_custom_call.1} parent=5 // pred_fallthru
        _
    $region6: #{tpu_custom_call.1} parent=1 // loop_footer
      %s21 = sadd.s32 1, %s17
    $region7: #{tpu_custom_call.1} parent=1 // loop_footer_branch
      %16 = sbr.rel target = $region3
    $region8: #{tpu_custom_call.1} parent=1 // loop_exit
      _
    %274 = vsyncpa [#allocation3], 1
    %s275 = scalar_lea.sflag [#allocation3], 1
    %276 = vsyncpa %s275, 1
    %277 = vsyncpa [#allocation6], 1
    %s278 = scalar_lea.sflag [#allocation6], 1
    %279 = vsyncpa %s278, 1
    %280 = vsyncpa [#allocation4], 1
    %s281 = scalar_lea.sflag [#allocation4], 1
    %282 = vsyncpa %s281, 1

</llo_original>
